<compile_context>
chip_gen: v5e
topology: v5e:2x2
jax: 0.10.0
libtpu: 0.0.40
codegen_flags: <defaults>
</compile_context>

<pallas_src>
import jax
import jax.numpy as jnp
from jax.experimental import pallas as pl
from jax.experimental.pallas import tpu as pltpu


def _llaaf_relu_kernel(c_ref, x_ref, o_ref):
    # c_ref: SMEM (1,) f32 holding n*a; x_ref/o_ref: VMEM tiles.
    c = c_ref[0]
    o_ref[...] = jnp.maximum(c * x_ref[...].astype(jnp.float32), 0.0).astype(o_ref.dtype)


def _device_tuning():
    """(target_block_bytes, single_tensorcore) based on the TPU generation."""
    try:
        kind = jax.devices()[0].device_kind.lower()
    except Exception:  # pragma: no cover - defensive
        kind = ""
    single_tc = any(f"v{g}" in kind for g in (2, 3, 4, 5, 6))   # 1 TC per chip
    old_gen = any(f"v{g}" in kind for g in (2, 3, 4, 5))        # small scoped VMEM / slow HBM
    target_block_bytes = (2 << 20) if old_gen else (4 << 20)    # v6e/v7x/unknown: 4 MiB
    return target_block_bytes, single_tc


def _plan(n_elems, itemsize, target_block_bytes, single_tc):
    """Pick (lane, rows, block_rows, grid, padded_elems) for the flat slab."""
    # Sublane granularity is dtype-aware: sub-32-bit dtypes pack rows.
    sublane = max(8, 32 // max(1, itemsize))   # 8 f32, 16 bf16, 32 int8/fp8

    if n_elems % 128 == 0:
        # Common DL case: exact factorization, no pad / slice needed.
        m = n_elems // 128
        d = 1
        for cand in range(min(32, m), 0, -1):   # lane = 128*d <= 4096
            if m % cand == 0:
                d = cand
                break
        lane = 128 * d
        rows = m // d
        padded_elems = n_elems
    else:
        # Truly ragged: minimal pad (< 128 elements) to one extra row.
        lane = 128
        rows = -(-n_elems // lane)
        padded_elems = rows * lane

    # Rows per block: multiple of `sublane`, sized to ~target_block_bytes.
    max_rows = max(sublane, (target_block_bytes // (lane * itemsize)) // sublane * sublane)

    if rows > max_rows:
        block_rows = max_rows                      # partial last block is legal/masked
    else:
        block_rows = rows                          # single block == full dim (legal)
        # On multi-TC chips, give the "parallel" axis >=2 steps when worthwhile.
        if (not single_tc and rows >= 2 * sublane
                and rows * lane * itemsize >= (512 << 10)):
            half = ((rows + 1) // 2 + sublane - 1) // sublane * sublane
            if half < rows:
                block_rows = half

    grid = -(-rows // block_rows)
    return lane, rows, block_rows, grid, padded_elems


def llaaf(x, a, n):
    """y = relu(n * a * x), elementwise over any-shaped x (ReLU L-LAAF)."""
    orig_shape = x.shape
    out_dtype = x.dtype
    n_elems = x.size
    itemsize = jnp.dtype(out_dtype).itemsize

    target_block_bytes, single_tc = _device_tuning()
    lane, rows, block_rows, grid, padded_elems = _plan(
        n_elems, itemsize, target_block_bytes, single_tc)

    # Fold the learnable scalar product once: c = n * a (f32, SMEM).
    c = (jnp.asarray(n, jnp.float32) * jnp.asarray(a, jnp.float32)).reshape((1,))

    x_flat = x.reshape((-1,))
    if padded_elems != n_elems:
        # Rare ragged path only (< 128 padded elements).
        # TODO(synk): consider CompilerParams(allow_input_fusion=...) so XLA
        # fuses this pad into the custom-call operand instead of
        # materializing the padded slab in HBM.
        x_flat = jnp.pad(x_flat, (0, padded_elems - n_elems))
    x_slab = x_flat.reshape((rows, lane))          # free bitcast of contiguous data

    block_bytes = block_rows * lane * itemsize
    # in + out, double-buffered, plus headroom; safe on every generation.
    vmem_limit = min(32 << 20, max(16 << 20, 4 * block_bytes + (4 << 20)))

    y_slab = pl.pallas_call(
        _llaaf_relu_kernel,
        out_shape=jax.ShapeDtypeStruct((rows, lane), out_dtype),
        grid_spec=pltpu.PrefetchScalarGridSpec(
            num_scalar_prefetch=0,
            grid=(grid,),
            in_specs=[
                pl.BlockSpec(memory_space=pltpu.SMEM),               # c = n*a
                pl.BlockSpec((block_rows, lane), lambda i: (i, 0)),  # x slab tile
            ],
            out_specs=pl.BlockSpec((block_rows, lane), lambda i: (i, 0)),
        ),
        compiler_params=pltpu.CompilerParams(
            dimension_semantics=("parallel",),
            vmem_limit_bytes=vmem_limit,
        ),
    )(c, x_slab)

    y_flat = y_slab.reshape((-1,))
    if padded_elems != n_elems:
        y_flat = y_flat[:n_elems]
    return y_flat.reshape(orig_shape)


if __name__ == "__main__":
    n = 10.0
    # Parameter init exactly as in the module: a = 1 / n
    a = jnp.float32(1.0 / n)

    key = jax.random.PRNGKey(0)
    k1, k2, k3, k4 = jax.random.split(key, 4)

    def ref_fn(x):
        y = jnp.maximum(jnp.float32(n) * a * x.astype(jnp.float32), 0.0)
        return y.astype(x.dtype)

    # 1) Typical 4-D f32 input (exact, zero-pad-free path)
    x1 = jax.random.normal(k1, (2, 4, 16, 16), dtype=jnp.float32)
    y1 = jax.block_until_ready(llaaf(x1, a, n))
    assert y1.shape == x1.shape and y1.dtype == x1.dtype
    assert jnp.allclose(y1, ref_fn(x1), atol=1e-6), "f32 mismatch vs reference"

    # 2) Non-divisible shape (exercises the minimal pad + slice fallback)
    x2 = jax.random.normal(k2, (7, 33), dtype=jnp.float32)
    y2 = jax.block_until_ready(llaaf(x2, a, n))
    assert y2.shape == x2.shape
    assert jnp.allclose(y2, ref_fn(x2), atol=1e-6), "ragged-shape mismatch vs reference"

    # 3) bf16 activations (compute in f32, cast on store; 16-row sublane granularity)
    x3 = jax.random.normal(k3, (8, 32), dtype=jnp.bfloat16)
    y3 = jax.block_until_ready(llaaf(x3, a, n))
    assert y3.dtype == jnp.bfloat16
    assert jnp.allclose(y3.astype(jnp.float32), ref_fn(x3).astype(jnp.float32),
                        atol=1e-2), "bf16 mismatch vs reference"

    # 4) Larger f32 input (exercises lane=4096 slab and the >=2-step split on v7x)
    x4 = jax.random.normal(k4, (64, 2048), dtype=jnp.float32)
    y4 = jax.block_until_ready(llaaf(x4, a, n))
    assert y4.shape == x4.shape
    assert jnp.allclose(y4, ref_fn(x4), atol=1e-6), "large-slab mismatch vs reference"

    print("KERNEL_OK")
</pallas_src>

<mosaic_0001>
module attributes {stable_mosaic.version = 11 : i64} {
  func.func @_llaaf_relu_kernel(%arg0: i32, %arg1: memref<1xf32, #tpu.memory_space<smem>>, %arg2: memref<1x2048xf32, #tpu.memory_space<vmem>>, %arg3: memref<1x2048xf32, #tpu.memory_space<vmem>>) attributes {dimension_semantics = [#tpu.dimension_semantics<parallel>], iteration_bounds = array<i64: 1>, scalar_prefetch = 0 : i64, scratch_operands = 0 : i64, tpu.core_type = #tpu.core_type<tc>, window_params = [{transform_indices = @transform_0, window_bounds = array<i64: 1>}, {transform_indices = @transform_1, window_bounds = array<i64: 1, 2048>}, {transform_indices = @transform_2, window_bounds = array<i64: 1, 2048>}]} {
    %c0 = arith.constant 0 : index
    %0 = memref.load %arg1[%c0] : memref<1xf32, #tpu.memory_space<smem>>
    %c0_0 = arith.constant 0 : index
    %c0_1 = arith.constant 0 : index
    %1 = vector.load %arg2[%c0_0, %c0_1] : memref<1x2048xf32, #tpu.memory_space<vmem>>, vector<1x2048xf32>
    %2 = vector.broadcast %0 : f32 to vector<1x2048xf32>
    %3 = arith.mulf %2, %1 : vector<1x2048xf32>
    %cst = arith.constant 0.000000e+00 : f32
    %4 = vector.broadcast %cst : f32 to vector<1x2048xf32>
    %5 = arith.maximumf %3, %4 : vector<1x2048xf32>
    %c0_2 = arith.constant 0 : index
    %c0_3 = arith.constant 0 : index
    %6 = vector.load %arg3[%c0_2, %c0_3] : memref<1x2048xf32, #tpu.memory_space<vmem>>, vector<1x2048xf32>
    tpu.vector_store %arg3[%c0_2, %c0_3], %5 {strides = array<i32>} : memref<1x2048xf32, #tpu.memory_space<vmem>>, vector<1x2048xf32>,
    return
  }
  func.func @transform_0(%arg0: i32) -> i32 {
    %c0_i32 = arith.constant 0 : i32
    %c0_i32_0 = arith.constant 0 : i32
    return %c0_i32 : i32
  }
  func.func @transform_1(%arg0: i32) -> (i32, i32) {
    %c0_i32 = arith.constant 0 : i32
    %c0_i32_0 = arith.constant 0 : i32
    return %arg0, %c0_i32 : i32, i32
  }
  func.func @transform_2(%arg0: i32) -> (i32, i32) {
    %c0_i32 = arith.constant 0 : i32
    %c0_i32_0 = arith.constant 0 : i32
    return %arg0, %c0_i32 : i32, i32
  }
}

</mosaic_0001>

<llo_original>
// kernel: tpu_custom_call.1
$region0: #{tpu_custom_call.1}
  #allocation0 [shape = 'u32[]', space=smem, size = 0x4, offset = 0x4, fixed_abs, tag = 'smem constant byte address 0x4 - core index']
  #allocation1 [shape = 'u32[72,128]{1,0:T(1,128)}', space=vmem, size = 0x9000, scoped, tag = 'internal scratch']
  #allocation2 [shape = 'f32[1]{0:T(128)S(6)}', space=smem, size = 0x200, scoped, tag = 'scoped memory for tpu_custom_call.1']
  %s0 = inlined_call_operand.<no memory space> [shape: f32[1], index: 0, kind: input, shape index: {}]
  %s1 = inlined_call_operand.hbm [shape: f32[1,2048], index: 1, kind: input, shape index: {}]
  %s2 = inlined_call_operand.hbm [shape: f32[1,2048], index: 2, kind: output, shape index: {}]
  %s3 = sld [smem:[#allocation0]]
  $region22: #{tpu_custom_call.1} parent=0
    _
  %s5 = ssub.s32 1, %s3
  %s6 = scalar_select 0, %s5, %s3
  %7 = sst [smem:[#allocation2]] %s0
  $region1: #{tpu_custom_call.1} parent=0
    #allocation3 [shape = 'u8[8192]{0}', space=vmem, size = 0x2000, scoped, tag = 'input window, operand 1, single buffered']
    #allocation4 [shape = 's32[1]{0}', space=sflag, size = 0x4, scoped, tag = 'scoped memory for tpu_custom_call.1']
    #allocation5 [shape = 's32[1]{0}', space=sflag, size = 0x4, scoped, tag = 'scoped memory for tpu_custom_call.1']
    #allocation6 [shape = 'u8[8192]{0}', space=vmem, size = 0x2000, scoped, tag = 'output window, operand 0, single buffered']
    %8 = vsyncpa [#allocation4], 0
    %9 = vsyncpa [#allocation5], 0
    // Predicated region
    $region2: #{tpu_custom_call.1} parent=1 // pred_check
      _
    $region3: #{tpu_custom_call.1} parent=1 // pred_check_branch
      %11 = sbr.rel (0) target = $region5
    $region4: #{tpu_custom_call.1} parent=1 // pred_region
      _
    $region5: #{tpu_custom_call.1} parent=1 // pred_fallthru
      _
    // Predicated region
    $region6: #{tpu_custom_call.1} parent=1 // pred_check
      _
    $region7: #{tpu_custom_call.1} parent=1 // pred_check_branch
      %13 = sbr.rel (0) target = $region9
    $region8: #{tpu_custom_call.1} parent=1 // pred_region
      %15 = vsyncadd [#allocation4], 0
      %s17 = sshll.u32 %s1, 4
      %s18 = int_to_ptr.hbm [resolvable:$true] %s17
      %s19 = sshll.u32 [#allocation3], 4
      %s20 = int_to_ptr.vmem [resolvable:$true] %s19
      %22 = dma.hbm_to_vmem [thread:$0]  %s18, 256, %s20, [#allocation4]
    $region9: #{tpu_custom_call.1} parent=1 // pred_fallthru
      _
    // Predicated region
    $region10: #{tpu_custom_call.1} parent=1 // pred_check
      _
    $region11: #{tpu_custom_call.1} parent=1 // pred_check_branch
      %24 = sbr.rel (0) target = $region13
    $region12: #{tpu_custom_call.1} parent=1 // pred_region
      %26 = dma.done [#allocation4], 256
    $region13: #{tpu_custom_call.1} parent=1 // pred_fallthru
      _
    %s27 = sld [smem:[#allocation2]]
    %v28 = vld [vmem:[#allocation3] sm:$0xff]
    %v29 = vld [vmem:[#allocation3 + $0x8] sm:$0xff]
    %v30 = vstv %s27
    %v31 = vmul.f32 %v30, %v28
    %v32 = vmul.f32 %v30, %v29
    %v33 = vmax.f32 %v31, 0.0
    %v34 = vmax.f32 %v32, 0.0
    %35 = vst [vmem:[#allocation6] sm:$0xff] %v33
    %36 = vst [vmem:[#allocation6 + $0x8] sm:$0xff] %v34
    // Predicated region
    $region14: #{tpu_custom_call.1} parent=1 // pred_check
      _
    $region15: #{tpu_custom_call.1} parent=1 // pred_check_branch
      %38 = sbr.rel (0) target = $region17
    $region16: #{tpu_custom_call.1} parent=1 // pred_region
      %40 = vsyncadd [#allocation5], 0
      %s42 = sshll.u32 [#allocation6], 4
      %s43 = int_to_ptr.vmem [resolvable:$true] %s42
      %s44 = sshll.u32 %s2, 4
      %s45 = int_to_ptr.hbm [resolvable:$true] %s44
      %47 = dma.vmem_to_hbm [thread:$0]  %s43, 256, %s45, [#allocation5]
    $region17: #{tpu_custom_call.1} parent=1 // pred_fallthru
      _
    // Predicated region
    $region18: #{tpu_custom_call.1} parent=1 // pred_check
      _
    $region19: #{tpu_custom_call.1} parent=1 // pred_check_branch
      %49 = sbr.rel (0) target = $region21
    $region20: #{tpu_custom_call.1} parent=1 // pred_region
      %51 = dma.done [#allocation5], 256
    $region21: #{tpu_custom_call.1} parent=1 // pred_fallthru
      _
    %52 = vsyncpa [#allocation4], 1
    %53 = vsyncpa [#allocation5], 1

</llo_original>
